<compile_context>
chip_gen: v6e
topology: v6e:2x2x1
jax: 0.10.0
libtpu: 0.0.40
codegen_flags: <defaults>
</compile_context>

<pallas_src>
import jax
import jax.numpy as jnp
from jax.experimental import pallas as pl
from jax.experimental.pallas import tpu as pltpu


def _dyat_affine_kernel(ap_ref, an_ref, w_ref, b_ref, x_ref, o_ref):
    # ap/an/w/b: (1, block_h) tiles, resident across row-grid steps.
    # x/o:       (block_rows, block_h) tiles.
    x = x_ref[...].astype(jnp.float32)
    alpha = jnp.where(x >= 0.0,
                      ap_ref[...].astype(jnp.float32),
                      an_ref[...].astype(jnp.float32))
    y = jnp.tanh(alpha * x)                                    # EUP, hidden under DMA
    y = y * w_ref[...].astype(jnp.float32) + b_ref[...].astype(jnp.float32)
    o_ref[...] = y.astype(o_ref.dtype)                         # single cast on store


def _dyat_kernel(ap_ref, an_ref, x_ref, o_ref):
    x = x_ref[...].astype(jnp.float32)
    alpha = jnp.where(x >= 0.0,
                      ap_ref[...].astype(jnp.float32),
                      an_ref[...].astype(jnp.float32))
    o_ref[...] = jnp.tanh(alpha * x).astype(o_ref.dtype)


def _round_up(n, m):
    return ((n + m - 1) // m) * m


def fast_dynamic_asymmetric_tanh(x, alpha_pos, alpha_neg, weight=None, bias=None,
                                 *, block_rows=None, block_h=None,
                                 target_tile_bytes=4 << 20):
    """x: (..., H). alpha_pos/alpha_neg: (H,). weight/bias: (H,) or None (non-affine)."""
    orig_shape = x.shape
    H = orig_shape[-1]
    x2 = x.reshape(-1, H)
    rows = x2.shape[0]
    itemsize = jnp.dtype(x.dtype).itemsize
    affine = weight is not None

    # Parameters stay f32 (matches the module's f32 nn.Parameters).
    ap2 = jnp.asarray(alpha_pos, jnp.float32).reshape(1, H)
    an2 = jnp.asarray(alpha_neg, jnp.float32).reshape(1, H)
    if affine:
        w2 = jnp.asarray(weight, jnp.float32).reshape(1, H)
        b2 = (jnp.zeros((1, H), jnp.float32) if bias is None
              else jnp.asarray(bias, jnp.float32).reshape(1, H))

    # --- tiling -------------------------------------------------------------
    # Lane-dense hidden axis: keep full H unless it is very large AND
    # 128-divisible, in which case split so the x/out tile fits the VMEM budget.
    if block_h is None:
        block_h = H if (H <= 4096 or H % 128 != 0) else 2048

    # Row-tile multiple keeps sublane packing per dtype (8 f32 / 16 bf16 / 32 int8).
    row_mult = 8 if itemsize >= 4 else (16 if itemsize == 2 else 32)
    if block_rows is None:
        block_rows = target_tile_bytes // max(1, block_h * itemsize)
        block_rows = max(row_mult, (block_rows // row_mult) * row_mult)
        block_rows = min(block_rows, 8192)
    # Never make a tile taller than the (padded) row count.
    block_rows = min(block_rows, max(row_mult, _round_up(rows, row_mult)))

    grid = (pl.cdiv(rows, block_rows), pl.cdiv(H, block_h))

    tile_bytes = block_rows * block_h * itemsize
    # x + out double-buffered plus small resident param tiles; cap at 48 MiB so
    # it fits v7x's 64 MiB physical VMEM with headroom.
    vmem_limit = int(min(max(4 * tile_bytes + (2 << 20), 16 << 20), 48 << 20))

    param_spec = pl.BlockSpec((1, block_h), lambda i, j: (0, j))
    tile_spec = pl.BlockSpec((block_rows, block_h), lambda i, j: (i, j))

    if affine:
        kernel = _dyat_affine_kernel
        in_specs = [param_spec, param_spec, param_spec, param_spec, tile_spec]
        args = (ap2, an2, w2, b2, x2)
    else:
        kernel = _dyat_kernel
        in_specs = [param_spec, param_spec, tile_spec]
        args = (ap2, an2, x2)

    out = pl.pallas_call(
        kernel,
        out_shape=jax.ShapeDtypeStruct((rows, H), x.dtype),
        grid=grid,
        in_specs=in_specs,
        out_specs=tile_spec,
        compiler_params=pltpu.CompilerParams(
            dimension_semantics=("parallel", "parallel"),
            vmem_limit_bytes=vmem_limit),
    )(*args)

    return out.reshape(orig_shape)


def fast_dyat_ref(x, alpha_pos, alpha_neg, weight=None, bias=None):
    xf = x.astype(jnp.float32)
    alpha = jnp.where(xf >= 0.0,
                      alpha_pos.astype(jnp.float32),
                      alpha_neg.astype(jnp.float32))
    out = jnp.tanh(alpha * xf)
    if weight is not None:
        out = out * weight.astype(jnp.float32)
        if bias is not None:
            out = out + bias.astype(jnp.float32)
    return out.astype(x.dtype)


if __name__ == "__main__":
    key = jax.random.PRNGKey(0)
    B, S, H = 2, 8, 128           # (batch, seq, hidden); hidden = normalized_shape
    alpha_init_value = 0.5
    smoothing = 10.0              # backward-only in the PyTorch module; unused in forward

    kx, kap, kan, kw, kb, kx2 = jax.random.split(key, 6)
    x = jax.random.normal(kx, (B, S, H), dtype=jnp.float32)

    # Parameter init matching the module, perturbed so the asymmetric / affine
    # paths are actually exercised.
    alpha_pos = jnp.full((H,), alpha_init_value, jnp.float32) \
        + 0.05 * jax.random.normal(kap, (H,), jnp.float32)
    alpha_neg = jnp.full((H,), alpha_init_value, jnp.float32) \
        + 0.05 * jax.random.normal(kan, (H,), jnp.float32)
    weight = jnp.ones((H,), jnp.float32) + 0.01 * jax.random.normal(kw, (H,), jnp.float32)
    bias = jnp.zeros((H,), jnp.float32) + 0.01 * jax.random.normal(kb, (H,), jnp.float32)

    # 1) affine path, f32
    y = jax.block_until_ready(
        fast_dynamic_asymmetric_tanh(x, alpha_pos, alpha_neg, weight, bias))
    y_ref = fast_dyat_ref(x, alpha_pos, alpha_neg, weight, bias)
    assert y.shape == x.shape and y.dtype == x.dtype
    assert jnp.allclose(y, y_ref, atol=1e-5, rtol=1e-5)

    # 2) non-affine path (elementwise_affine=False)
    y2 = jax.block_until_ready(fast_dynamic_asymmetric_tanh(x, alpha_pos, alpha_neg))
    y2_ref = fast_dyat_ref(x, alpha_pos, alpha_neg)
    assert jnp.allclose(y2, y2_ref, atol=1e-5, rtol=1e-5)

    # 3) bf16 input with a row count that does not divide the tile
    #    (exercises masked partial edge tile + explicit dtype cast on store).
    xb = jax.random.normal(kx2, (3, 37, H), dtype=jnp.float32).astype(jnp.bfloat16)
    yb = jax.block_until_ready(
        fast_dynamic_asymmetric_tanh(xb, alpha_pos, alpha_neg, weight, bias))
    yb_ref = fast_dyat_ref(xb, alpha_pos, alpha_neg, weight, bias)
    assert yb.shape == xb.shape and yb.dtype == jnp.bfloat16
    assert jnp.allclose(yb.astype(jnp.float32), yb_ref.astype(jnp.float32),
                        atol=2e-2, rtol=2e-2)

    # TODO(synk): HardSigmoidWithSmoothGrad's smoothed-sigmoid backward is a
    # training-time custom gradient; this kernel implements the forward only.
    print("KERNEL_OK")
</pallas_src>

<mosaic_0001>
module attributes {stable_mosaic.version = 11 : i64} {
  func.func @_dyat_affine_kernel(%arg0: i32, %arg1: i32, %arg2: memref<1x128xf32, #tpu.memory_space<vmem>>, %arg3: memref<1x128xf32, #tpu.memory_space<vmem>>, %arg4: memref<1x128xf32, #tpu.memory_space<vmem>>, %arg5: memref<1x128xf32, #tpu.memory_space<vmem>>, %arg6: memref<16x128xf32, #tpu.memory_space<vmem>>, %arg7: memref<16x128xf32, #tpu.memory_space<vmem>>) attributes {dimension_semantics = [#tpu.dimension_semantics<parallel>, #tpu.dimension_semantics<parallel>], iteration_bounds = array<i64: 1, 1>, scalar_prefetch = 0 : i64, scratch_operands = 0 : i64, tpu.core_type = #tpu.core_type<tc>, window_params = [{transform_indices = @transform_0, window_bounds = array<i64: 1, 128>}, {transform_indices = @transform_1, window_bounds = array<i64: 1, 128>}, {transform_indices = @transform_2, window_bounds = array<i64: 1, 128>}, {transform_indices = @transform_3, window_bounds = array<i64: 1, 128>}, {transform_indices = @transform_4, window_bounds = array<i64: 16, 128>}, {transform_indices = @transform_5, window_bounds = array<i64: 16, 128>}]} {
    %c0 = arith.constant 0 : index
    %c0_0 = arith.constant 0 : index
    %0 = vector.load %arg6[%c0, %c0_0] : memref<16x128xf32, #tpu.memory_space<vmem>>, vector<16x128xf32>
    %cst = arith.constant 0.000000e+00 : f32
    %1 = vector.broadcast %cst : f32 to vector<16x128xf32>
    %2 = arith.cmpf oge, %0, %1 : vector<16x128xf32>
    %c0_1 = arith.constant 0 : index
    %c0_2 = arith.constant 0 : index
    %3 = vector.load %arg2[%c0_1, %c0_2] : memref<1x128xf32, #tpu.memory_space<vmem>>, vector<1x128xf32>
    %c0_3 = arith.constant 0 : index
    %c0_4 = arith.constant 0 : index
    %4 = vector.load %arg3[%c0_3, %c0_4] : memref<1x128xf32, #tpu.memory_space<vmem>>, vector<1x128xf32>
    %5 = vector.shape_cast %3 : vector<1x128xf32> to vector<1x128xf32>
    %6 = vector.broadcast %5 : vector<1x128xf32> to vector<16x128xf32>
    %7 = vector.shape_cast %4 : vector<1x128xf32> to vector<1x128xf32>
    %8 = vector.broadcast %7 : vector<1x128xf32> to vector<16x128xf32>
    %9 = arith.select %2, %6, %8 : vector<16x128xi1>, vector<16x128xf32>
    %10 = arith.mulf %9, %0 : vector<16x128xf32>
    %11 = math.tanh %10 : vector<16x128xf32>
    %c0_5 = arith.constant 0 : index
    %c0_6 = arith.constant 0 : index
    %12 = vector.load %arg4[%c0_5, %c0_6] : memref<1x128xf32, #tpu.memory_space<vmem>>, vector<1x128xf32>
    %13 = vector.broadcast %12 : vector<1x128xf32> to vector<16x128xf32>
    %14 = arith.mulf %11, %13 : vector<16x128xf32>
    %c0_7 = arith.constant 0 : index
    %c0_8 = arith.constant 0 : index
    %15 = vector.load %arg5[%c0_7, %c0_8] : memref<1x128xf32, #tpu.memory_space<vmem>>, vector<1x128xf32>
    %16 = vector.broadcast %15 : vector<1x128xf32> to vector<16x128xf32>
    %17 = arith.addf %14, %16 : vector<16x128xf32>
    %c0_9 = arith.constant 0 : index
    %c0_10 = arith.constant 0 : index
    %18 = vector.load %arg7[%c0_9, %c0_10] : memref<16x128xf32, #tpu.memory_space<vmem>>, vector<16x128xf32>
    tpu.vector_store %arg7[%c0_9, %c0_10], %17 {strides = array<i32>} : memref<16x128xf32, #tpu.memory_space<vmem>>, vector<16x128xf32>,
    return
  }
  func.func @transform_0(%arg0: i32, %arg1: i32) -> (i32, i32) {
    %c0_i32 = arith.constant 0 : i32
    %c0_i32_0 = arith.constant 0 : i32
    return %c0_i32, %arg1 : i32, i32
  }
  func.func @transform_1(%arg0: i32, %arg1: i32) -> (i32, i32) {
    %c0_i32 = arith.constant 0 : i32
    %c0_i32_0 = arith.constant 0 : i32
    return %c0_i32, %arg1 : i32, i32
  }
  func.func @transform_2(%arg0: i32, %arg1: i32) -> (i32, i32) {
    %c0_i32 = arith.constant 0 : i32
    %c0_i32_0 = arith.constant 0 : i32
    return %c0_i32, %arg1 : i32, i32
  }
  func.func @transform_3(%arg0: i32, %arg1: i32) -> (i32, i32) {
    %c0_i32 = arith.constant 0 : i32
    %c0_i32_0 = arith.constant 0 : i32
    return %c0_i32, %arg1 : i32, i32
  }
  func.func @transform_4(%arg0: i32, %arg1: i32) -> (i32, i32) {
    %c0_i32 = arith.constant 0 : i32
    return %arg0, %arg1 : i32, i32
  }
  func.func @transform_5(%arg0: i32, %arg1: i32) -> (i32, i32) {
    %c0_i32 = arith.constant 0 : i32
    return %arg0, %arg1 : i32, i32
  }
}

</mosaic_0001>

<llo_original>
// kernel: tpu_custom_call.1
$region0: #{tpu_custom_call.1}
  #allocation0 [shape = 'u32[]', space=smem, size = 0x4, offset = 0x4, fixed_abs, tag = 'smem constant byte address 0x4 - core index']
  #allocation1 [shape = 'u32[144,128]{1,0:T(1,128)}', space=vmem, size = 0x12000, scoped, tag = 'internal scratch']
  %s0 = inlined_call_operand.hbm [shape: f32[1,128], index: 0, kind: input, shape index: {}]
  %s1 = inlined_call_operand.vmem [shape: f32[1,128], index: 1, kind: input, shape index: {}]
  %s2 = inlined_call_operand.vmem [shape: f32[1,128], index: 2, kind: input, shape index: {}]
  %s3 = inlined_call_operand.vmem [shape: f32[1,128], index: 3, kind: input, shape index: {}]
  %s4 = inlined_call_operand.hbm [shape: f32[16,128], index: 4, kind: input, shape index: {}]
  %s5 = inlined_call_operand.hbm [shape: f32[16,128], index: 5, kind: output, shape index: {}]
  %s6 = sld [smem:[#allocation0]]
  $region38: #{tpu_custom_call.1} parent=0
    _
  %s8 = ssub.s32 1, %s6
  %s9 = scalar_select 0, %s8, %s6
  $region1: #{tpu_custom_call.1} parent=0
    #allocation2 [shape = 'u8[512]{0}', space=vmem, size = 0x400, scoped, tag = 'input window, operand 0, single buffered']
    #allocation3 [shape = 's32[1]{0}', space=sflag, size = 0x4, scoped, tag = 'scoped memory for tpu_custom_call.1']
    #allocation4 [shape = 's32[1]{0}', space=sflag, size = 0x4, scoped, tag = 'scoped memory for tpu_custom_call.1']
    #allocation5 [shape = 'u8[8192]{0}', space=vmem, size = 0x2000, scoped, tag = 'input window, operand 4, single buffered']
    #allocation6 [shape = 's32[1]{0}', space=sflag, size = 0x4, scoped, tag = 'scoped memory for tpu_custom_call.1']
    #allocation7 [shape = 'u8[8192]{0}', space=vmem, size = 0x2000, scoped, tag = 'output window, operand 0, single buffered']
    %10 = vsyncpa [#allocation3], 0
    %11 = vsyncpa [#allocation6], 0
    %12 = vsyncpa [#allocation4], 0
    // Predicated region
    $region2: #{tpu_custom_call.1} parent=1 // pred_check
      _
    $region3: #{tpu_custom_call.1} parent=1 // pred_check_branch
      %14 = sbr.rel (0) target = $region5
    $region4: #{tpu_custom_call.1} parent=1 // pred_region
      %s16 = ssub.s32 16, 16
      %17 = vsyncadd [#allocation3], %s16
      %s19 = sshll.u32 [#allocation2], 4
      %s20 = int_to_ptr.vmem [resolvable:$true] %s19
      %22 = dma.hbm_to_vmem [thread:$0]  %s0, 16, %s20, [#allocation3]
    $region5: #{tpu_custom_call.1} parent=1 // pred_fallthru
      _
    // Predicated region
    $region6: #{tpu_custom_call.1} parent=1 // pred_check
      _
    $region7: #{tpu_custom_call.1} parent=1 // pred_check_branch
      %24 = sbr.rel (0) target = $region9
    $region8: #{tpu_custom_call.1} parent=1 // pred_region
      _
    $region9: #{tpu_custom_call.1} parent=1 // pred_fallthru
      _
    // Predicated region
    $region10: #{tpu_custom_call.1} parent=1 // pred_check
      _
    $region11: #{tpu_custom_call.1} parent=1 // pred_check_branch
      %26 = sbr.rel (0) target = $region13
    $region12: #{tpu_custom_call.1} parent=1 // pred_region
      _
    $region13: #{tpu_custom_call.1} parent=1 // pred_fallthru
      _
    // Predicated region
    $region14: #{tpu_custom_call.1} parent=1 // pred_check
      _
    $region15: #{tpu_custom_call.1} parent=1 // pred_check_branch
      %28 = sbr.rel (0) target = $region17
    $region16: #{tpu_custom_call.1} parent=1 // pred_region
      _
    $region17: #{tpu_custom_call.1} parent=1 // pred_fallthru
      _
    // Predicated region
    $region18: #{tpu_custom_call.1} parent=1 // pred_check
      _
    $region19: #{tpu_custom_call.1} parent=1 // pred_check_branch
      %30 = sbr.rel (0) target = $region21
    $region20: #{tpu_custom_call.1} parent=1 // pred_region
      %s32 = ssub.s32 256, 256
      %33 = vsyncadd [#allocation6], %s32
      %s34 = sshll.u32 [#allocation5], 4
      %s35 = int_to_ptr.vmem [resolvable:$true] %s34
      %40 = dma.hbm_to_vmem [thread:$0]  %s4, 256, %s35, [#allocation6], 128, 128, 8
    $region21: #{tpu_custom_call.1} parent=1 // pred_fallthru
      _
    // Predicated region
    $region22: #{tpu_custom_call.1} parent=1 // pred_check
      _
    $region23: #{tpu_custom_call.1} parent=1 // pred_check_branch
      %42 = sbr.rel (0) target = $region25
    $region24: #{tpu_custom_call.1} parent=1 // pred_region
      %43 = dma.done [#allocation3], 16
    $region25: #{tpu_custom_call.1} parent=1 // pred_fallthru
      _
    // Predicated region
    $region26: #{tpu_custom_call.1} parent=1 // pred_check
      _
    $region27: #{tpu_custom_call.1} parent=1 // pred_check_branch
      %45 = sbr.rel (0) target = $region29
    $region28: #{tpu_custom_call.1} parent=1 // pred_region
      %46 = dma.done [#allocation6], 256
    $region29: #{tpu_custom_call.1} parent=1 // pred_fallthru
      _
    %v47 = vld [vmem:[#allocation5] sm:$0xff]
    %v48 = vld [vmem:[#allocation5 + $0x8] sm:$0xff]
    %vm49 = vcmp.ge.f32.partialorder %v47, 0.0
    %vm50 = vcmp.ge.f32.partialorder %v48, 0.0
    %v51 = vld [vmem:[#allocation2] sm:$0x1]
    %v52 = vld [vmem:[%s1] sm:$0x1]
    %v54 = vlaneseq
    %v55 = vshrl.u32 %v54, 7
    %v56 = vsub.s32 0, %v55
    %v57 = vrot.slane %v51, %v56
    %v60 = vlaneseq
    %v61 = vshrl.u32 %v60, 7
    %v62 = vsub.s32 0, %v61
    %v63 = vrot.slane %v52, %v62
    %v65 = vsel %vm49, %v57, %v63
    %v66 = vsel %vm50, %v57, %v63
    %v67 = vmul.f32 %v65, %v47
    %v68 = vmul.f32 %v66, %v48
    %v69 = vtanh.pop %v67
    %v70 = vtanh.pop %v68
    %v71 = vld [vmem:[%s2] sm:$0x1]
    %v73 = vlaneseq
    %v74 = vshrl.u32 %v73, 7
    %v75 = vsub.s32 0, %v74
    %v76 = vrot.slane %v71, %v75
    %v78 = vmul.f32 %v69, %v76
    %v79 = vmul.f32 %v70, %v76
    %v80 = vld [vmem:[%s3] sm:$0x1]
    %v82 = vlaneseq
    %v83 = vshrl.u32 %v82, 7
    %v84 = vsub.s32 0, %v83
    %v85 = vrot.slane %v80, %v84
    %v87 = vadd.f32 %v78, %v85
    %v88 = vadd.f32 %v79, %v85
    %89 = vst [vmem:[#allocation7] sm:$0xff] %v87
    %90 = vst [vmem:[#allocation7 + $0x8] sm:$0xff] %v88
    // Predicated region
    $region30: #{tpu_custom_call.1} parent=1 // pred_check
      _
    $region31: #{tpu_custom_call.1} parent=1 // pred_check_branch
      %92 = sbr.rel (0) target = $region33
    $region32: #{tpu_custom_call.1} parent=1 // pred_region
      %s94 = ssub.s32 256, 256
      %95 = vsyncadd [#allocation4], %s94
      %s96 = sshll.u32 [#allocation7], 4
      %s97 = int_to_ptr.vmem [resolvable:$true] %s96
      %102 = dma.vmem_to_hbm [thread:$0]  %s97, 256, %s5, [#allocation4], 128, 128, 8
    $region33: #{tpu_custom_call.1} parent=1 // pred_fallthru
      _
    // Predicated region
    $region34: #{tpu_custom_call.1} parent=1 // pred_check
      _
    $region35: #{tpu_custom_call.1} parent=1 // pred_check_branch
      %104 = sbr.rel (0) target = $region37
    $region36: #{tpu_custom_call.1} parent=1 // pred_region
      %105 = dma.done [#allocation4], 256
    $region37: #{tpu_custom_call.1} parent=1 // pred_fallthru
      _
    %106 = vsyncpa [#allocation3], 1
    %107 = vsyncpa [#allocation6], 1
    %108 = vsyncpa [#allocation4], 1

</llo_original>
